<compile_context>
chip_gen: v7x
topology: tpu7x:2x2x1
jax: 0.10.0
libtpu: 0.0.40
codegen_flags: <defaults>
</compile_context>

<pallas_src>
import functools

import jax
import jax.numpy as jnp
from jax.experimental import pallas as pl
from jax.experimental.pallas import tpu as pltpu


def _round_up(x, m):
    return ((x + m - 1) // m) * m


def _pick_pixel_tile(hwp, n_batch, cap=16384):
    """Largest multiple of 128 that divides hwp (hwp is a multiple of 128),
    capped at `cap`.  Only force >=2 tiles when batch==1 so v7x's second
    TensorCore gets work; on single-TC chips fewer/fatter steps are better."""
    limit = min(cap, hwp)
    tp = 128
    cand = limit - (limit % 128)
    while cand >= 128:
        if hwp % cand == 0:
            tp = cand
            break
        cand -= 128
    if n_batch == 1 and tp == hwp and hwp >= 256:
        half = hwp // 2
        cand = half - (half % 128)
        while cand >= 128:
            if hwp % cand == 0:
                tp = cand
                break
            cand -= 128
    return tp


def _cspn_generate_kernel(feat_ref, w_ref, b_ref, out_ref, col_ref, *,
                          width2, halo):
    # feat_ref: (Cin, TP + 2*halo)  halo'ed window of the width-padded,
    #                               row-major flattened feature (pixels on lanes)
    # w_ref:    (Cout, 9*Cin)       conv weight with BN scale folded in
    # b_ref:    (Cout, 1)           folded BN bias
    # out_ref:  (Cout+1, TP)        guide weights, centre channel inserted
    # col_ref:  (9*Cin, TP)         VMEM im2col scratch
    cin = feat_ref.shape[0]
    cout = w_ref.shape[0]
    half = cout // 2
    tp = out_ref.shape[-1]

    # Assemble the 9-tap im2col matrix with STATIC lane offsets.  Taps that
    # fall outside the image read zeros that the wrapper padded into the
    # window (width padding + vertical margins), so no masking is needed.
    for t in range(9):
        dy, dx = t // 3, t % 3
        off = halo + (dy - 1) * width2 + (dx - 1)
        col_ref[t * cin:(t + 1) * cin, :] = feat_ref[:, off:off + tp]

    # One MXU matmul for the whole 3x3 conv, + folded BN bias.
    g = jnp.dot(w_ref[...], col_ref[...],
                preferred_element_type=jnp.float32) + b_ref[...]

    # abs-sum normalisation: one (1, TP) reciprocal + VPU multiplies instead of
    # a (Cout, TP) broadcast divide and a second 25-row reduction.
    s_abs = jnp.sum(jnp.abs(g), axis=0, keepdims=True)
    s_raw = jnp.sum(g, axis=0, keepdims=True)
    inv = pl.reciprocal(s_abs, approx=False)
    guide = g * inv
    mid = 1.0 - s_raw * inv

    # Single aligned full-tile store with the centre channel inserted.
    out_ref[...] = jnp.concatenate([guide[:half], mid, guide[half:]], axis=0)


def cspn_generate(feature_nchw, conv_w, bn_gamma, bn_beta, bn_mean, bn_var,
                  kernel_size, eps=1e-5):
    """feature_nchw: (N, Cin, H, W); conv_w: (Cout, Cin, 3, 3), Cout = K*K-1.
    Returns (N, K*K, H, W) (NCHW), matching the PyTorch module."""
    N, Cin, H, W = feature_nchw.shape
    Cout = kernel_size * kernel_size - 1
    assert conv_w.shape == (Cout, Cin, 3, 3)

    # Width-pad so every 3x3 tap is a constant shift of the flattened pixel
    # axis (row stride W+2); the two junk columns per row are sliced off at the
    # end.  Vertical out-of-range taps land in the zero margins.
    W2 = W + 2
    HW2 = H * W2
    HW2p = _round_up(HW2, 128)            # lane-dense output (pad, slice back)
    halo = _round_up(W2 + 1, 128)         # >= largest tap shift, 128-aligned

    x = feature_nchw.astype(jnp.float32)
    flat = jnp.pad(x, ((0, 0), (0, 0), (0, 0), (1, 1))).reshape(N, Cin, HW2)
    flat = jnp.pad(flat, ((0, 0), (0, 0), (halo, (HW2p - HW2) + halo)))

    TP = _pick_pixel_tile(HW2p, N)
    n_tiles = HW2p // TP
    TPW = TP + 2 * halo
    # Overlapping halo windows, one per pixel tile: (N, n_tiles, Cin, TPW).
    windows = jnp.stack(
        [flat[:, :, p * TP:p * TP + TPW] for p in range(n_tiles)], axis=1)

    # Fold BN (eval) into the conv weight / bias; weight rows ordered (tap, cin)
    # to match the im2col assembly above.
    w2 = jnp.transpose(conv_w, (0, 2, 3, 1)).reshape(Cout, 9 * Cin)
    w2 = w2.astype(jnp.float32)
    inv_std = 1.0 / jnp.sqrt(bn_var.astype(jnp.float32) + eps)
    scale = bn_gamma.astype(jnp.float32) * inv_std                  # (Cout,)
    w_f = w2 * scale[:, None]                                       # (Cout, 9*Cin)
    bias = (bn_beta.astype(jnp.float32)
            - bn_mean.astype(jnp.float32) * scale).reshape(Cout, 1)

    kernel = functools.partial(_cspn_generate_kernel, width2=W2, halo=halo)

    vmem_bytes = (2 * Cin * TPW + 2 * (Cout + 1) * TP + 9 * Cin * TP) * 4 + (1 << 20)
    cost = pl.CostEstimate(
        flops=2 * N * Cout * 9 * Cin * HW2p,
        transcendentals=N * HW2p,
        bytes_accessed=4 * (N * n_tiles * Cin * TPW
                            + N * (Cout + 1) * HW2p
                            + Cout * 9 * Cin + Cout))

    out_flat = pl.pallas_call(
        kernel,
        out_shape=jax.ShapeDtypeStruct((N, Cout + 1, HW2p), jnp.float32),
        grid=(N, n_tiles),
        in_specs=[
            pl.BlockSpec((None, None, Cin, TPW), lambda n, p: (n, p, 0, 0)),
            pl.BlockSpec((Cout, 9 * Cin), lambda n, p: (0, 0)),
            pl.BlockSpec((Cout, 1), lambda n, p: (0, 0)),
        ],
        out_specs=pl.BlockSpec((None, Cout + 1, TP), lambda n, p: (n, 0, p)),
        scratch_shapes=[pltpu.VMEM((9 * Cin, TP), jnp.float32)],
        compiler_params=pltpu.CompilerParams(
            dimension_semantics=("parallel", "parallel"),
            vmem_limit_bytes=min(64 * 1024 * 1024,
                                 max(2 * vmem_bytes, 16 * 1024 * 1024))),
        cost_estimate=cost,
    )(windows, w_f, bias)

    # Drop the lane padding and the two junk columns from the width padding.
    out = out_flat[:, :, :HW2].reshape(N, Cout + 1, H, W2)[:, :, :, 1:W + 1]
    return out


def cspn_generate_ref(feature, conv_w, gamma, beta, mean, var, kernel_size,
                      eps=1e-5):
    """Pure-JAX reference (NCHW), mirrors the PyTorch forward."""
    guide = jax.lax.conv_general_dilated(
        feature, conv_w, window_strides=(1, 1), padding=((1, 1), (1, 1)),
        dimension_numbers=("NCHW", "OIHW", "NCHW"),
        precision=jax.lax.Precision.HIGHEST)
    scale = gamma / jnp.sqrt(var + eps)
    bias = beta - mean * scale
    guide = guide * scale[None, :, None, None] + bias[None, :, None, None]
    gsum = jnp.sum(jnp.abs(guide), axis=1, keepdims=True)
    guide = guide / gsum
    mid = 1.0 - jnp.sum(guide, axis=1, keepdims=True)
    half = (kernel_size * kernel_size - 1) // 2
    return jnp.concatenate([guide[:, :half], mid, guide[:, half:]], axis=1)


if __name__ == "__main__":
    N, Cin, H, W = 2, 4, 16, 16
    K = 5                       # kernel_size of CSPNGenerate
    Cout = K * K - 1

    key = jax.random.PRNGKey(0)
    k1, k2, k3, k4, k5, k6 = jax.random.split(key, 6)
    feature = jax.random.normal(k1, (N, Cin, H, W), jnp.float32)
    conv_w = 0.1 * jax.random.normal(k2, (Cout, Cin, 3, 3), jnp.float32)
    bn_gamma = 1.0 + 0.1 * jax.random.normal(k3, (Cout,), jnp.float32)
    bn_beta = 0.1 * jax.random.normal(k4, (Cout,), jnp.float32)
    bn_mean = 0.1 * jax.random.normal(k5, (Cout,), jnp.float32)
    bn_var = 1.0 + 0.5 * jax.random.uniform(k6, (Cout,), jnp.float32)

    fn = jax.jit(functools.partial(cspn_generate, kernel_size=K))
    out = fn(feature, conv_w, bn_gamma, bn_beta, bn_mean, bn_var)
    out = jax.block_until_ready(out)

    assert out.shape == (N, K * K, H, W), out.shape
    ref = cspn_generate_ref(feature, conv_w, bn_gamma, bn_beta, bn_mean,
                            bn_var, K)
    if not jnp.allclose(out, ref, rtol=1e-2, atol=1e-3):
        raise AssertionError("Pallas kernel output does not match JAX reference")

    print("KERNEL_OK")
</pallas_src>

<mosaic_0001>
module attributes {stable_mosaic.version = 11 : i64} {
  func.func @_cspn_generate_kernel(%arg0: i32, %arg1: i32, %arg2: memref<1x1x4x640xf32, #tpu.memory_space<vmem>>, %arg3: memref<24x36xf32, #tpu.memory_space<vmem>>, %arg4: memref<24x1xf32, #tpu.memory_space<vmem>>, %arg5: memref<1x25x384xf32, #tpu.memory_space<vmem>>, %arg6: memref<36x384xf32, #tpu.memory_space<vmem>>) attributes {dimension_semantics = [#tpu.dimension_semantics<parallel>, #tpu.dimension_semantics<parallel>], iteration_bounds = array<i64: 2, 1>, scalar_prefetch = 0 : i64, scratch_operands = 1 : i64, tpu.core_type = #tpu.core_type<tc>, window_params = [{transform_indices = @transform_0, window_bounds = array<i64: 1, 1, 4, 640>}, {pipeline_mode = #tpu.pipeline_mode<synchronous>, transform_indices = @transform_1, window_bounds = array<i64: 24, 36>}, {pipeline_mode = #tpu.pipeline_mode<synchronous>, transform_indices = @transform_2, window_bounds = array<i64: 24, 1>}, {transform_indices = @transform_3, window_bounds = array<i64: 1, 25, 384>}]} {
    %c0 = arith.constant 0 : index
    %c0_0 = arith.constant 0 : index
    %c0_1 = arith.constant 0 : index
    %c109 = arith.constant 109 : index
    %0 = vector.load %arg2[%c0, %c0_0, %c0_1, %c109] : memref<1x1x4x640xf32, #tpu.memory_space<vmem>>, vector<1x1x4x384xf32>
    %1 = vector.shape_cast %0 : vector<1x1x4x384xf32> to vector<4x384xf32>
    %c0_2 = arith.constant 0 : index
    %c0_3 = arith.constant 0 : index
    %2 = vector.load %arg6[%c0_2, %c0_3] : memref<36x384xf32, #tpu.memory_space<vmem>>, vector<4x384xf32>
    tpu.vector_store %arg6[%c0_2, %c0_3], %1 {strides = array<i32>} : memref<36x384xf32, #tpu.memory_space<vmem>>, vector<4x384xf32>,
    %c0_4 = arith.constant 0 : index
    %c0_5 = arith.constant 0 : index
    %c0_6 = arith.constant 0 : index
    %c110 = arith.constant 110 : index
    %3 = vector.load %arg2[%c0_4, %c0_5, %c0_6, %c110] : memref<1x1x4x640xf32, #tpu.memory_space<vmem>>, vector<1x1x4x384xf32>
    %4 = vector.shape_cast %3 : vector<1x1x4x384xf32> to vector<4x384xf32>
    %c4 = arith.constant 4 : index
    %c0_7 = arith.constant 0 : index
    %5 = vector.load %arg6[%c4, %c0_7] : memref<36x384xf32, #tpu.memory_space<vmem>>, vector<4x384xf32>
    tpu.vector_store %arg6[%c4, %c0_7], %4 {strides = array<i32>} : memref<36x384xf32, #tpu.memory_space<vmem>>, vector<4x384xf32>,
    %c0_8 = arith.constant 0 : index
    %c0_9 = arith.constant 0 : index
    %c0_10 = arith.constant 0 : index
    %c111 = arith.constant 111 : index
    %6 = vector.load %arg2[%c0_8, %c0_9, %c0_10, %c111] : memref<1x1x4x640xf32, #tpu.memory_space<vmem>>, vector<1x1x4x384xf32>
    %7 = vector.shape_cast %6 : vector<1x1x4x384xf32> to vector<4x384xf32>
    %c8 = arith.constant 8 : index
    %c0_11 = arith.constant 0 : index
    %8 = vector.load %arg6[%c8, %c0_11] : memref<36x384xf32, #tpu.memory_space<vmem>>, vector<4x384xf32>
    tpu.vector_store %arg6[%c8, %c0_11], %7 {strides = array<i32>} : memref<36x384xf32, #tpu.memory_space<vmem>>, vector<4x384xf32>,
    %c0_12 = arith.constant 0 : index
    %c0_13 = arith.constant 0 : index
    %c0_14 = arith.constant 0 : index
    %c127 = arith.constant 127 : index
    %9 = vector.load %arg2[%c0_12, %c0_13, %c0_14, %c127] : memref<1x1x4x640xf32, #tpu.memory_space<vmem>>, vector<1x1x4x384xf32>
    %10 = vector.shape_cast %9 : vector<1x1x4x384xf32> to vector<4x384xf32>
    %c12 = arith.constant 12 : index
    %c0_15 = arith.constant 0 : index
    %11 = vector.load %arg6[%c12, %c0_15] : memref<36x384xf32, #tpu.memory_space<vmem>>, vector<4x384xf32>
    tpu.vector_store %arg6[%c12, %c0_15], %10 {strides = array<i32>} : memref<36x384xf32, #tpu.memory_space<vmem>>, vector<4x384xf32>,
    %c0_16 = arith.constant 0 : index
    %c0_17 = arith.constant 0 : index
    %c0_18 = arith.constant 0 : index
    %c128 = arith.constant 128 : index
    %12 = vector.load %arg2[%c0_16, %c0_17, %c0_18, %c128] : memref<1x1x4x640xf32, #tpu.memory_space<vmem>>, vector<1x1x4x384xf32>
    %13 = vector.shape_cast %12 : vector<1x1x4x384xf32> to vector<4x384xf32>
    %c16 = arith.constant 16 : index
    %c0_19 = arith.constant 0 : index
    %14 = vector.load %arg6[%c16, %c0_19] : memref<36x384xf32, #tpu.memory_space<vmem>>, vector<4x384xf32>
    tpu.vector_store %arg6[%c16, %c0_19], %13 {strides = array<i32>} : memref<36x384xf32, #tpu.memory_space<vmem>>, vector<4x384xf32>,
    %c0_20 = arith.constant 0 : index
    %c0_21 = arith.constant 0 : index
    %c0_22 = arith.constant 0 : index
    %c129 = arith.constant 129 : index
    %15 = vector.load %arg2[%c0_20, %c0_21, %c0_22, %c129] : memref<1x1x4x640xf32, #tpu.memory_space<vmem>>, vector<1x1x4x384xf32>
    %16 = vector.shape_cast %15 : vector<1x1x4x384xf32> to vector<4x384xf32>
    %c20 = arith.constant 20 : index
    %c0_23 = arith.constant 0 : index
    %17 = vector.load %arg6[%c20, %c0_23] : memref<36x384xf32, #tpu.memory_space<vmem>>, vector<4x384xf32>
    tpu.vector_store %arg6[%c20, %c0_23], %16 {strides = array<i32>} : memref<36x384xf32, #tpu.memory_space<vmem>>, vector<4x384xf32>,
    %c0_24 = arith.constant 0 : index
    %c0_25 = arith.constant 0 : index
    %c0_26 = arith.constant 0 : index
    %c145 = arith.constant 145 : index
    %18 = vector.load %arg2[%c0_24, %c0_25, %c0_26, %c145] : memref<1x1x4x640xf32, #tpu.memory_space<vmem>>, vector<1x1x4x384xf32>
    %19 = vector.shape_cast %18 : vector<1x1x4x384xf32> to vector<4x384xf32>
    %c24 = arith.constant 24 : index
    %c0_27 = arith.constant 0 : index
    %20 = vector.load %arg6[%c24, %c0_27] : memref<36x384xf32, #tpu.memory_space<vmem>>, vector<4x384xf32>
    tpu.vector_store %arg6[%c24, %c0_27], %19 {strides = array<i32>} : memref<36x384xf32, #tpu.memory_space<vmem>>, vector<4x384xf32>,
    %c0_28 = arith.constant 0 : index
    %c0_29 = arith.constant 0 : index
    %c0_30 = arith.constant 0 : index
    %c146 = arith.constant 146 : index
    %21 = vector.load %arg2[%c0_28, %c0_29, %c0_30, %c146] : memref<1x1x4x640xf32, #tpu.memory_space<vmem>>, vector<1x1x4x384xf32>
    %22 = vector.shape_cast %21 : vector<1x1x4x384xf32> to vector<4x384xf32>
    %c28 = arith.constant 28 : index
    %c0_31 = arith.constant 0 : index
    %23 = vector.load %arg6[%c28, %c0_31] : memref<36x384xf32, #tpu.memory_space<vmem>>, vector<4x384xf32>
    tpu.vector_store %arg6[%c28, %c0_31], %22 {strides = array<i32>} : memref<36x384xf32, #tpu.memory_space<vmem>>, vector<4x384xf32>,
    %c0_32 = arith.constant 0 : index
    %c0_33 = arith.constant 0 : index
    %c0_34 = arith.constant 0 : index
    %c147 = arith.constant 147 : index
    %24 = vector.load %arg2[%c0_32, %c0_33, %c0_34, %c147] : memref<1x1x4x640xf32, #tpu.memory_space<vmem>>, vector<1x1x4x384xf32>
    %25 = vector.shape_cast %24 : vector<1x1x4x384xf32> to vector<4x384xf32>
    %c32 = arith.constant 32 : index
    %c0_35 = arith.constant 0 : index
    %26 = vector.load %arg6[%c32, %c0_35] : memref<36x384xf32, #tpu.memory_space<vmem>>, vector<4x384xf32>
    tpu.vector_store %arg6[%c32, %c0_35], %25 {strides = array<i32>} : memref<36x384xf32, #tpu.memory_space<vmem>>, vector<4x384xf32>,
    %c0_36 = arith.constant 0 : index
    %c0_37 = arith.constant 0 : index
    %27 = vector.load %arg3[%c0_36, %c0_37] : memref<24x36xf32, #tpu.memory_space<vmem>>, vector<24x36xf32>
    %c0_38 = arith.constant 0 : index
    %c0_39 = arith.constant 0 : index
    %28 = vector.load %arg6[%c0_38, %c0_39] : memref<36x384xf32, #tpu.memory_space<vmem>>, vector<36x384xf32>
    %cst = arith.constant dense<0.000000e+00> : vector<24x384xf32>
    %29 = tpu.matmul %27, %28, %cst {dimension_numbers = #tpu.dot_dimension_numbers<[1], [0], [0], [1], [0, 0, 1, 1], [], []>} : vector<24x36xf32>, vector<36x384xf32>, vector<24x384xf32> -> vector<24x384xf32>
    %c0_40 = arith.constant 0 : index
    %c0_41 = arith.constant 0 : index
    %30 = vector.load %arg4[%c0_40, %c0_41] : memref<24x1xf32, #tpu.memory_space<vmem>>, vector<24x1xf32>
    %31 = vector.broadcast %30 : vector<24x1xf32> to vector<24x384xf32>
    %32 = arith.addf %29, %31 : vector<24x384xf32>
    %33 = math.absf %32 : vector<24x384xf32>
    %cst_42 = arith.constant dense<0.000000e+00> : vector<384xf32>
    %34 = vector.multi_reduction <add>, %33, %cst_42 [0] : vector<24x384xf32> to vector<384xf32>
    %35 = vector.shape_cast %34 : vector<384xf32> to vector<1x384xf32>
    %cst_43 = arith.constant dense<0.000000e+00> : vector<384xf32>
    %36 = vector.multi_reduction <add>, %32, %cst_43 [0] : vector<24x384xf32> to vector<384xf32>
    %37 = vector.shape_cast %36 : vector<384xf32> to vector<1x384xf32>
    %38 = tpu.reciprocal %35 : vector<1x384xf32> -> vector<1x384xf32>
    %39 = vector.broadcast %38 : vector<1x384xf32> to vector<24x384xf32>
    %40 = arith.mulf %32, %39 : vector<24x384xf32>
    %41 = arith.mulf %37, %38 : vector<1x384xf32>
    %cst_44 = arith.constant 1.000000e+00 : f32
    %42 = vector.broadcast %cst_44 : f32 to vector<1x384xf32>
    %43 = arith.subf %42, %41 : vector<1x384xf32>
    %44 = vector.extract_strided_slice %40 {offsets = [0, 0], sizes = [12, 384], strides = [1, 1]} : vector<24x384xf32> to vector<12x384xf32>
    %45 = vector.extract_strided_slice %40 {offsets = [12, 0], sizes = [12, 384], strides = [1, 1]} : vector<24x384xf32> to vector<12x384xf32>
    %46 = tpu.concatenate %44, %43, %45 in 0 : vector<12x384xf32>, vector<1x384xf32>, vector<12x384xf32> -> vector<25x384xf32>
    %c0_45 = arith.constant 0 : index
    %c0_46 = arith.constant 0 : index
    %c0_47 = arith.constant 0 : index
    %47 = vector.load %arg5[%c0_45, %c0_46, %c0_47] : memref<1x25x384xf32, #tpu.memory_space<vmem>>, vector<1x25x384xf32>
    %48 = vector.shape_cast %47 : vector<1x25x384xf32> to vector<25x384xf32>
    %49 = vector.shape_cast %46 : vector<25x384xf32> to vector<1x25x384xf32>
    tpu.vector_store %arg5[%c0_45, %c0_46, %c0_47], %49 {strides = array<i32>} : memref<1x25x384xf32, #tpu.memory_space<vmem>>, vector<1x25x384xf32>,
    return
  }
  func.func @transform_0(%arg0: i32, %arg1: i32) -> (i32, i32, i32, i32) {
    %c0_i32 = arith.constant 0 : i32
    %c0_i32_0 = arith.constant 0 : i32
    %c0_i32_1 = arith.constant 0 : i32
    return %arg0, %arg1, %c0_i32, %c0_i32_0 : i32, i32, i32, i32
  }
  func.func @transform_1(%arg0: i32, %arg1: i32) -> (i32, i32) {
    %c0_i32 = arith.constant 0 : i32
    %c0_i32_0 = arith.constant 0 : i32
    %c0_i32_1 = arith.constant 0 : i32
    return %c0_i32, %c0_i32_0 : i32, i32
  }
  func.func @transform_2(%arg0: i32, %arg1: i32) -> (i32, i32) {
    %c0_i32 = arith.constant 0 : i32
    %c0_i32_0 = arith.constant 0 : i32
    %c0_i32_1 = arith.constant 0 : i32
    return %c0_i32, %c0_i32_0 : i32, i32
  }
  func.func @transform_3(%arg0: i32, %arg1: i32) -> (i32, i32, i32) {
    %c0_i32 = arith.constant 0 : i32
    %c0_i32_0 = arith.constant 0 : i32
    return %arg0, %c0_i32, %arg1 : i32, i32, i32
  }
}

</mosaic_0001>

<llo_original>
// kernel: cspn_generate.1
$region0: #{cspn_generate.1}
  #allocation0 [shape = 'u32[]', space=smem, size = 0x4, offset = 0x4, fixed_abs, tag = 'smem constant byte address 0x4 - core index']
  #allocation1 [shape = 'u32[144,128]{1,0:T(1,128)}', space=vmem, size = 0x12000, scoped, tag = 'internal scratch']
  #allocation2 [shape = 'f32[36,384]{1,0:T(8,128)}', space=vmem, size = 0xf000, scoped, tag = 'scratch operand']
  %s0 = inlined_call_operand.vmem [shape: f32[2,1,4,640], index: 0, kind: input, shape index: {}]
  %s1 = inlined_call_operand.vmem [shape: f32[24,36], index: 1, kind: input, shape index: {}]
  %s2 = inlined_call_operand.vmem [shape: f32[24,1], index: 2, kind: input, shape index: {}]
  %s3 = inlined_call_operand.vmem [shape: f32[2,25,384], index: 3, kind: output, shape index: {}]
  %s4 = sld [smem:[#allocation0]]
  $region45: #{cspn_generate.1} parent=0
    _
  %s6 = ssub.s32 1, %s4
  %s7 = scalar_select 0, %s6, %s4
  loop: start=0, step=1, limit=4
  $region2: #{cspn_generate.1} parent=0 // loop_pre_header
    _
  $region3: #{cspn_generate.1} parent=0 // loop_header
    %s9 = sphi 0, %s13
    %p10 = scmp.ge.s32.totalorder %s9, 4
    %s16 = sphi 0, %s28
    %s17 = sphi 0, %s24
    %s18 = sphi 0, %s16
    %s19 = sphi 0, %s17
    %s20 = sphi 0, %s18
    %s21 = sphi 0, %s19
    %s33 = sphi 0, %s35
    %s36 = sphi 0, %s33
    %s37 = sphi 0, %s36
    %s53 = sphi 0, %s37
    %s57 = sphi 0, %s57
    %s59 = sphi 0, %s57
    %s60 = sphi 0, %s59
    %s74 = sphi 0, %s60
    %s78 = sphi 0, %s78
    %s80 = sphi 0, %s78
    %s81 = sphi 0, %s80
    %s95 = sphi 0, %s81
    %s103 = sphi 0, %s105
    %s106 = sphi 0, %s103
    %s107 = sphi 0, %s106
    %s123 = sphi 0, %s107
  $region4: #{cspn_generate.1} parent=0 // loop_header_branch
    %12 = sbr.rel (%p10) target = $region8
  $region5: #{cspn_generate.1} parent=0 // loop_body
    %s14 = ssub.s32 %s9, 1
    %s15 = ssub.s32 %s9, 2
    %s22 = sadd.s32 1, %s17
    %p23 = scmp.ge.s32.totalorder %s22, 1
    %s24 = scalar_select %p23, 0, %s22
    %s25 = sadd.s32 1, %s16
    %s26 = scalar_select %p23, %s25, %s16
    %p27 = scmp.ge.s32.totalorder %s26, 2
    %s28 = scalar_select %p27, 0, %s26
    %s29 = ssub.s32 %s16, %s28
    %s30 = ssub.s32 %s17, %s24
    %s31 = sor.u32 %s29, %s30
    %p32 = scmp.eq.s32.totalorder %s31, 0
    %s34 = sadd.s32 %s33, 1
    %s35 = scalar_select %p32, %s33, %s34
    %p38 = pneg %p32
    %p39 = scmp.eq.s32.totalorder %s9, 1
    %p40 = por %p38, %p39
    %p41 = scmp.ne.s32.totalorder %s33, %s36
    %p42 = scmp.eq.s32.totalorder %s9, 0
    %p43 = por %p41, %p42
    %p44 = scmp.ne.s32.totalorder %s33, %s36
    %p45 = scmp.eq.s32.totalorder %s14, 1
    %p46 = por %p44, %p45
    %p47 = scmp.ne.s32.totalorder %s36, %s37
    %p48 = scmp.eq.s32.totalorder %s14, 0
    %p49 = por %p47, %p48
    %p50 = scmp.ne.s32.totalorder %s36, %s37
    %p51 = scmp.eq.s32.totalorder %s15, 1
    %p52 = por %p50, %p51
    %p54 = scmp.ne.s32.totalorder %s37, %s53
    %p55 = scmp.eq.s32.totalorder %s15, 0
    %p56 = por %p54, %p55
    %s58 = sadd.s32 %s57, 1
    %p61 = scmp.eq.s32.totalorder %s9, 1
    %p62 = scmp.ne.s32.totalorder %s57, %s59
    %p63 = scmp.eq.s32.totalorder %s9, 0
    %p64 = por %p62, %p63
    %p65 = scmp.ne.s32.totalorder %s57, %s59
    %p66 = scmp.eq.s32.totalorder %s14, 1
    %p67 = por %p65, %p66
    %p68 = scmp.ne.s32.totalorder %s59, %s60
    %p69 = scmp.eq.s32.totalorder %s14, 0
    %p70 = por %p68, %p69
    %p71 = scmp.ne.s32.totalorder %s59, %s60
    %p72 = scmp.eq.s32.totalorder %s15, 1
    %p73 = por %p71, %p72
    %p75 = scmp.ne.s32.totalorder %s60, %s74
    %p76 = scmp.eq.s32.totalorder %s15, 0
    %p77 = por %p75, %p76
    %s79 = sadd.s32 %s78, 1
    %p82 = scmp.eq.s32.totalorder %s9, 1
    %p83 = scmp.ne.s32.totalorder %s78, %s80
    %p84 = scmp.eq.s32.totalorder %s9, 0
    %p85 = por %p83, %p84
    %p86 = scmp.ne.s32.totalorder %s78, %s80
    %p87 = scmp.eq.s32.totalorder %s14, 1
    %p88 = por %p86, %p87
    %p89 = scmp.ne.s32.totalorder %s80, %s81
    %p90 = scmp.eq.s32.totalorder %s14, 0
    %p91 = por %p89, %p90
    %p92 = scmp.ne.s32.totalorder %s80, %s81
    %p93 = scmp.eq.s32.totalorder %s15, 1
    %p94 = por %p92, %p93
    %p96 = scmp.ne.s32.totalorder %s81, %s95
    %p97 = scmp.eq.s32.totalorder %s15, 0
    %p98 = por %p96, %p97
    %s99 = ssub.s32 %s16, %s28
    %s100 = ssub.s32 %s17, %s24
    %s101 = sor.u32 %s99, %s100
    %p102 = scmp.eq.s32.totalorder %s101, 0
    %s104 = sadd.s32 %s103, 1
    %s105 = scalar_select %p102, %s103, %s104
    %p108 = pneg %p102
    %p109 = scmp.eq.s32.totalorder %s9, 1
    %p110 = por %p108, %p109
    %p111 = scmp.ne.s32.totalorder %s103, %s106
    %p112 = scmp.eq.s32.totalorder %s9, 0
    %p113 = por %p111, %p112
    %p114 = scmp.ne.s32.totalorder %s103, %s106
    %p115 = scmp.eq.s32.totalorder %s14, 1
    %p116 = por %p114, %p115
    %p117 = scmp.ne.s32.totalorder %s106, %s107
    %p118 = scmp.eq.s32.totalorder %s14, 0
    %p119 = por %p117, %p118
    %p120 = scmp.ne.s32.totalorder %s106, %s107
    %p121 = scmp.eq.s32.totalorder %s15, 1
    %p122 = por %p120, %p121
    %p124 = scmp.ne.s32.totalorder %s107, %s123
    %p125 = scmp.eq.s32.totalorder %s15, 0
    %p126 = por %p124, %p125
    %p127 = scmp.le.s32.totalorder 1, %s9
    %p128 = scmp.lt.s32.totalorder %s9, 3
    %p129 = pnand %p127, %p128
    %p130 = pneg %p129
    // Predicated region
    $region9: #{cspn_generate.1} parent=5 // pred_check
      _
    $region10: #{cspn_generate.1} parent=5 // pred_check_branch
      %132 = sbr.rel (%p129) target = $region12
    $region11: #{cspn_generate.1} parent=5 // pred_region
      %s133 = ssub.s32 %s9, 1
      // Predicated region
      $region13: #{cspn_generate.1} parent=11 // pred_check
        %p134 = pneg %p70
      $region14: #{cspn_generate.1} parent=11 // pred_check_branch
        %136 = sbr.rel (%p134) target = $region16
      $region15: #{cspn_generate.1} parent=11 // pred_region
        _
      $region16: #{cspn_generate.1} parent=11 // pred_fallthru
        _
      // Predicated region
      $region17: #{cspn_generate.1} parent=11 // pred_check
        %p137 = pneg %p91
      $region18: #{cspn_generate.1} parent=11 // pred_check_branch
        %139 = sbr.rel (%p137) target = $region20
      $region19: #{cspn_generate.1} parent=11 // pred_region
        _
      $region20: #{cspn_generate.1} parent=11 // pred_fallthru
        _
    $region12: #{cspn_generate.1} parent=5 // pred_fallthru
      _
    %p140 = scmp.lt.s32.totalorder %s9, 2
    // Predicated region
    $region21: #{cspn_generate.1} parent=5 // pred_check
      %p141 = pneg %p140
    $region22: #{cspn_generate.1} parent=5 // pred_check_branch
      %143 = sbr.rel (%p141) target = $region24
    $region23: #{cspn_generate.1} parent=5 // pred_region
      // Predicated region
      $region25: #{cspn_generate.1} parent=23 // pred_check
        %p144 = pneg %p43
      $region26: #{cspn_generate.1} parent=23 // pred_check_branch
        %146 = sbr.rel (%p144) target = $region28
      $region27: #{cspn_generate.1} parent=23 // pred_region
        %p147 = scmp.lt.s32.totalorder %s16, 1
        %s148 = scalar_select %p147, %s16, 1
        %p149 = scmp.lt.s32.totalorder %s17, 0
        %s150 = scalar_select %p149, %s17, 0
        %s151 = smul.addr %s150, 5
        %s152 = smul.addr %s148, 5
        %s153 = sadd.s32 %s151, %s152
        %s154 = smul.addr %s153, 4
        %s155 = scalar_lea.vmem %s0, %s154
      $region28: #{cspn_generate.1} parent=23 // pred_fallthru
        _
    $region24: #{cspn_generate.1} parent=5 // pred_fallthru
      _
    %p156 = scmp.le.s32.totalorder 1, %s9
    %p157 = scmp.lt.s32.totalorder %s9, 3
    %p158 = pnand %p156, %p157
    %p159 = pneg %p158
    // Predicated region
    $region29: #{cspn_generate.1} parent=5 // pred_check
      _
    $region30: #{cspn_generate.1} parent=5 // pred_check_branch
      %161 = sbr.rel (%p158) target = $region32
    $region31: #{cspn_generate.1} parent=5 // pred_region
      %s162 = ssub.s32 %s9, 1
      %p163 = scmp.lt.s32.totalorder %s18, 1
      %s164 = scalar_select %p163, %s18, 1
      %p165 = scmp.lt.s32.totalorder %s19, 0
      %s166 = scalar_select %p165, %s19, 0
      %s167 = smul.addr %s166, 5
      %s168 = smul.addr %s164, 5
      %s169 = sadd.s32 %s167, %s168
      %s170 = smul.addr %s169, 4
      %s171 = scalar_lea.vmem %s0, %s170
      %p172 = pneg %p49
      %p173 = pneg %p46
      %p174 = pneg %p70
      %p175 = pneg %p67
      %p176 = pneg %p91
      %p177 = pneg %p88
      %p178 = pneg %p119
      %p179 = pneg %p116
      %s180 = smul.u32 3, %s19
      %p181 = scmp.lt.s32.totalorder %s18, 1
      %s182 = scalar_select %p181, %s18, 1
      %p183 = scmp.lt.s32.totalorder %s180, 2
      %s184 = scalar_select %p183, %s180, 2
      %s185 = smul.addr %s182, 12
      %s186 = sadd.s32 %s184, %s185
      %s187 = smul.addr %s186, 8
      %s188 = scalar_lea.vmem %s3, %s187
      %p189 = scmp.lt.s32.totalorder %s18, 1
      %s190 = scalar_select %p189, %s18, 1
      %p191 = scmp.lt.s32.totalorder %s19, 0
      %s192 = scalar_select %p191, %s19, 0
      %s193 = smul.addr %s192, 5
      %s194 = smul.addr %s190, 5
      %s195 = sadd.s32 %s193, %s194
      %s196 = smul.addr %s195, 4
      %s197 = scalar_lea.vmem %s0, %s196
      %s198 = smul.u32 3, %s19
      %p199 = scmp.lt.s32.totalorder %s18, 1
      %s200 = scalar_select %p199, %s18, 1
      %p201 = scmp.lt.s32.totalorder %s198, 2
      %s202 = scalar_select %p201, %s198, 2
      %s203 = smul.addr %s200, 12
      %s204 = sadd.s32 %s202, %s203
      %s205 = smul.addr %s204, 8
      %s206 = scalar_lea.vmem %s3, %s205
      %s207 = smul.u32 3, %s19
      %v208 = vld [vmem:[%s197] sm:$0xff]
      %v209 = vld [vmem:[%s197 + $0x8] sm:$0xff]
      %v212 = vcombine.high %v208, %v208
      %v213 = vcombine.high %v209, %v209
      %214 = vrot.lane.b32.xlu0 %v208, 19
      %v215 = vpop.permute.xlu0 %214
      %216 = vrot.lane.b32.xlu0 %v212, 19
      %v217 = vpop.permute.xlu0 %216
      %218 = vrot.lane.b32.xlu0 %v209, 19
      %v219 = vpop.permute.xlu0 %218
      %220 = vrot.lane.b32.xlu0 %v213, 19
      %v221 = vpop.permute.xlu0 %220
      %vm222 = vcmask 154624
      %v223 = vsel %vm222, %v215, %v217
      %v224 = vsel %vm222, %v217, %v219
      %v225 = vsel %vm222, %v219, %v221
      %229 = vst [vmem:[#allocation2] sm:$0xf] %v223
      %230 = vst [vmem:[#allocation2 + $0x8] sm:$0xf] %v224
      %231 = vst [vmem:[#allocation2 + $0x10] sm:$0xf] %v225
      %v232 = vld [vmem:[%s197] sm:$0xff]
      %v233 = vld [vmem:[%s197 + $0x8] sm:$0xff]
      %v236 = vcombine.low %v232, %v232
      %v237 = vcombine.low %v233, %v233
      %238 = vrot.lane.b32.xlu0 %v236, 18
      %v239 = vpop.permute.xlu0 %238
      %240 = vrot.lane.b32.xlu0 %v232, 18
      %v241 = vpop.permute.xlu0 %240
      %242 = vrot.lane.b32.xlu0 %v237, 18
      %v243 = vpop.permute.xlu0 %242
      %244 = vrot.lane.b32.xlu0 %v233, 18
      %v245 = vpop.permute.xlu0 %244
      %vm246 = vcmask 146432
      %v247 = vsel %vm246, %v239, %v241
      %v248 = vsel %vm246, %v241, %v243
      %v249 = vsel %vm246, %v243, %v245
      %253 = vst [vmem:[#allocation2] sm:$0xf0] %v247
      %254 = vst [vmem:[#allocation2 + $0x8] sm:$0xf0] %v248
      %255 = vst [vmem:[#allocation2 + $0x10] sm:$0xf0] %v249
      %v256 = vld [vmem:[%s197] sm:$0xff]
      %v257 = vld [vmem:[%s197 + $0x8] sm:$0xff]
      %v260 = vcombine.high %v256, %v256
      %v261 = vcombine.high %v257, %v257
      %262 = vrot.lane.b32.xlu0 %v256, 17
      %v263 = vpop.permute.xlu0 %262
      %264 = vrot.lane.b32.xlu0 %v260, 17
      %v265 = vpop.permute.xlu0 %264
      %266 = vrot.lane.b32.xlu0 %v257, 17
      %v267 = vpop.permute.xlu0 %266
      %268 = vrot.lane.b32.xlu0 %v261, 17
      %v269 = vpop.permute.xlu0 %268
      %vm270 = vcmask 138240
      %v271 = vsel %vm270, %v263, %v265
      %v272 = vsel %vm270, %v265, %v267
      %v273 = vsel %vm270, %v267, %v269
      %277 = vst [vmem:[#allocation2 + $0x18] sm:$0xf] %v271
      %278 = vst [vmem:[#allocation2 + $0x20] sm:$0xf] %v272
      %279 = vst [vmem:[#allocation2 + $0x28] sm:$0xf] %v273
      %v280 = vld [vmem:[%s197] sm:$0xff]
      %v281 = vld [vmem:[%s197 + $0x8] sm:$0xff]
      %v284 = vcombine.low %v280, %v280
      %v285 = vcombine.low %v281, %v281
      %286 = vrot.lane.b32.xlu0 %v284, 1
      %v287 = vpop.permute.xlu0 %286
      %288 = vrot.lane.b32.xlu0 %v280, 1
      %v289 = vpop.permute.xlu0 %288
      %290 = vrot.lane.b32.xlu0 %v285, 1
      %v291 = vpop.permute.xlu0 %290
      %292 = vrot.lane.b32.xlu0 %v281, 1
      %v293 = vpop.permute.xlu0 %292
      %vm294 = vcmask 7168
      %v295 = vsel %vm294, %v287, %v289
      %v296 = vsel %vm294, %v289, %v291
      %v297 = vsel %vm294, %v291, %v293
      %301 = vst [vmem:[#allocation2 + $0x18] sm:$0xf0] %v295
      %302 = vst [vmem:[#allocation2 + $0x20] sm:$0xf0] %v296
      %303 = vst [vmem:[#allocation2 + $0x28] sm:$0xf0] %v297
      %v304 = vld [vmem:[%s197 + $0x4] sm:$0xff]
      %v305 = vld [vmem:[%s197 + $0xc] sm:$0xf]
      %v307 = vcombine.high %v304, %v304
      %309 = vst [vmem:[#allocation2 + $0x30] sm:$0xf] %v304
      %310 = vst [vmem:[#allocation2 + $0x38] sm:$0xf] %v307
      %311 = vst [vmem:[#allocation2 + $0x40] sm:$0xf] %v305
      %v312 = vld [vmem:[%s197 + $0x4] sm:$0xff]
      %v313 = vld [vmem:[%s197 + $0xc] sm:$0xff]
      %v316 = vcombine.low %v312, %v312
      %v317 = vcombine.low %v313, %v313
      %318 = vrot.lane.b32.xlu0 %v316, 127
      %v319 = vpop.permute.xlu0 %318
      %320 = vrot.lane.b32.xlu0 %v312, 127
      %v321 = vpop.permute.xlu0 %320
      %322 = vrot.lane.b32.xlu0 %v317, 127
      %v323 = vpop.permute.xlu0 %322
      %324 = vrot.lane.b32.xlu0 %v313, 127
      %v325 = vpop.permute.xlu0 %324
      %vm326 = vcmask 1039360
      %v327 = vsel %vm326, %v319, %v321
      %v328 = vsel %vm326, %v321, %v323
      %v329 = vsel %vm326, %v323, %v325
      %333 = vst [vmem:[#allocation2 + $0x30] sm:$0xf0] %v327
      %334 = vst [vmem:[#allocation2 + $0x38] sm:$0xf0] %v328
      %335 = vst [vmem:[#allocation2 + $0x40] sm:$0xf0] %v329
      %v336 = vld [vmem:[%s197 + $0x4] sm:$0xff]
      %v337 = vld [vmem:[%s197 + $0xc] sm:$0xff]
      %v340 = vcombine.high %v336, %v336
      %v341 = vcombine.high %v337, %v337
      %342 = vrot.lane.b32.xlu0 %v336, 111
      %v343 = vpop.permute.xlu0 %342
      %344 = vrot.lane.b32.xlu0 %v340, 111
      %v345 = vpop.permute.xlu0 %344
      %346 = vrot.lane.b32.xlu0 %v337, 111
      %v347 = vpop.permute.xlu0 %346
      %348 = vrot.lane.b32.xlu0 %v341, 111
      %v349 = vpop.permute.xlu0 %348
      %vm350 = vcmask 908288
      %v351 = vsel %vm350, %v343, %v345
      %v352 = vsel %vm350, %v345, %v347
      %v353 = vsel %vm350, %v347, %v349
      %357 = vst [vmem:[#allocation2 + $0x48] sm:$0xf] %v351
      %358 = vst [vmem:[#allocation2 + $0x50] sm:$0xf] %v352
      %359 = vst [vmem:[#allocation2 + $0x58] sm:$0xf] %v353
      %v360 = vld [vmem:[%s197 + $0x4] sm:$0xff]
      %v361 = vld [vmem:[%s197 + $0xc] sm:$0xff]
      %v364 = vcombine.low %v360, %v360
      %v365 = vcombine.low %v361, %v361
      %366 = vrot.lane.b32.xlu0 %v364, 110
      %v367 = vpop.permute.xlu0 %366
      %368 = vrot.lane.b32.xlu0 %v360, 110
      %v369 = vpop.permute.xlu0 %368
      %370 = vrot.lane.b32.xlu0 %v365, 110
      %v371 = vpop.permute.xlu0 %370
      %372 = vrot.lane.b32.xlu0 %v361, 110
      %v373 = vpop.permute.xlu0 %372
      %vm374 = vcmask 900096
      %v375 = vsel %vm374, %v367, %v369
      %v376 = vsel %vm374, %v369, %v371
      %v377 = vsel %vm374, %v371, %v373
      %381 = vst [vmem:[#allocation2 + $0x48] sm:$0xf0] %v375
      %382 = vst [vmem:[#allocation2 + $0x50] sm:$0xf0] %v376
      %383 = vst [vmem:[#allocation2 + $0x58] sm:$0xf0] %v377
      %v384 = vld [vmem:[%s197 + $0x4] sm:$0xff]
      %v385 = vld [vmem:[%s197 + $0xc] sm:$0xff]
      %v388 = vcombine.high %v384, %v384
      %v389 = vcombine.high %v385, %v385
      %390 = vrot.lane.b32.xlu0 %v384, 109
      %v391 = vpop.permute.xlu0 %390
      %392 = vrot.lane.b32.xlu0 %v388, 109
      %v393 = vpop.permute.xlu0 %392
      %394 = vrot.lane.b32.xlu0 %v385, 109
      %v395 = vpop.permute.xlu0 %394
      %396 = vrot.lane.b32.xlu0 %v389, 109
      %v397 = vpop.permute.xlu0 %396
      %vm398 = vcmask 891904
      %v399 = vsel %vm398, %v391, %v393
      %v400 = vsel %vm398, %v393, %v395
      %v401 = vsel %vm398, %v395, %v397
      %405 = vst [vmem:[#allocation2 + $0x60] sm:$0xf] %v399
      %406 = vst [vmem:[#allocation2 + $0x68] sm:$0xf] %v400
      %407 = vst [vmem:[#allocation2 + $0x70] sm:$0xf] %v401
      %v408 = vld [vmem:[%s1] sm:$0xff]
      %v409 = vld [vmem:[%s1 + $0x8] sm:$0xff]
      %v410 = vld [vmem:[%s1 + $0x10] sm:$0xff]
      %v411 = vld [vmem:[#allocation2] sm:$0xff]
      %v412 = vld [vmem:[#allocation2 + $0x8] sm:$0xff]
      %v413 = vld [vmem:[#allocation2 + $0x10] sm:$0xff]
      %v414 = vld [vmem:[#allocation2 + $0x18] sm:$0xff]
      %v415 = vld [vmem:[#allocation2 + $0x20] sm:$0xff]
      %v416 = vld [vmem:[#allocation2 + $0x28] sm:$0xff]
      %v417 = vld [vmem:[#allocation2 + $0x30] sm:$0xff]
      %v418 = vld [vmem:[#allocation2 + $0x38] sm:$0xff]
      %v419 = vld [vmem:[#allocation2 + $0x40] sm:$0xff]
      %v420 = vld [vmem:[#allocation2 + $0x48] sm:$0xff]
      %v421 = vld [vmem:[#allocation2 + $0x50] sm:$0xff]
      %v422 = vld [vmem:[#allocation2 + $0x58] sm:$0xff]
      %v423 = vld [vmem:[#allocation2 + $0x60] sm:$0xf]
      %v424 = vld [vmem:[#allocation2 + $0x68] sm:$0xf]
      %v425 = vld [vmem:[#allocation2 + $0x70] sm:$0xf]
      %v426 = vld [vmem:[%s2] sm:$0xff]
      %v427 = vld [vmem:[%s2 + $0x8] sm:$0xff]
      %v428 = vld [vmem:[%s2 + $0x10] sm:$0xff]
      %430 = vset.pattern.permute.xlu0 0
      %431 = vperm.xlu0 %430, %v426
      %v432 = vpop.permute.xlu0 %431
      %435 = vset.pattern.permute.xlu0 0
      %436 = vperm.xlu0 %435, %v427
      %v437 = vpop.permute.xlu0 %436
      %440 = vset.pattern.permute.xlu0 0
      %441 = vperm.xlu0 %440, %v428
      %v442 = vpop.permute.xlu0 %441
      %vm444 = vcmask 293888
      %v446 = vsel %vm444, %v408, 0
      %v449 = vsel %vm444, %v409, 0
      %v452 = vsel %vm444, %v410, 0
      %vm454 = vcmask 1043456
      %v456 = vsel %vm454, %v423, 0
      %v459 = vsel %vm454, %v424, 0
      %v462 = vsel %vm454, %v425, 0
      %464 = vmatprep.subr.mxu0 %v412
      %465 = vmatpush1.msra.mxu0 %v411
      %466 = vmatprep.subr.mxu0 %v415
      %467 = vmatpush1.msra.mxu0 %v414
      %468 = vmatprep.subr.mxu0 %v418
      %469 = vmatpush1.msra.mxu0 %v417
      %470 = vmatprep.subr.mxu0 %v421
      %471 = vmatpush1.msra.mxu0 %v420
      %472 = vmatprep.subr.mxu0 %v459
      %473 = vmatpush1.msra.mxu0 %v456
      %474 = vmatprep.subr.mxu0 0.0
      %475 = vmatpush1.msra.mxu0 0.0
      %476 = vmatprep.subr.mxu0 0.0
      %477 = vmatpush1.msra.mxu0 0.0
      %478 = vmatprep.subr.mxu0 0.0
      %479 = vmatpush1.msra.mxu0 0.0
      %480 = vmatprep.subr.mxu0 0.0
      %481 = vmatpush1.msra.mxu0 0.0
      %482 = vmatprep.subr.mxu0 0.0
      %483 = vmatpush1.msra.mxu0 0.0
      %484 = vmatprep.subr.mxu0 0.0
      %485 = vmatpush1.msra.mxu0 0.0
      %486 = vmatprep.subr.mxu0 0.0
      %487 = vmatpush1.msra.mxu0 0.0
      %488 = vmatprep.subr.mxu0 0.0
      %489 = vmatpush1.msra.mxu0 0.0
      %490 = vmatprep.subr.mxu0 0.0
      %491 = vmatpush1.msra.mxu0 0.0
      %492 = vmatprep.subr.mxu0 0.0
      %493 = vmatpush1.msra.mxu0 0.0
      %494 = vmatprep.subr.mxu0 0.0
      %495 = vmatpush1.msra.mxu0 0.0
      %496 = vmatprep.subr.mxu0 0.0
      %497 = vmatpush1.msra.mxu0 0.0
      %498 = vmatprep.subr.mxu0 0.0
      %499 = vmatpush1.msra.mxu0 0.0
      %500 = vmatprep.subr.mxu0 0.0
      %501 = vmatpush1.msra.mxu0 0.0
      %502 = vmatprep.subr.mxu0 0.0
      %503 = vmatpush1.msra.mxu0 0.0
      %504 = vmatprep.subr.mxu0 0.0
      %505 = vmatpush1.msra.mxu0 0.0
      %506 = vmatprep.subr.mxu0 0.0
      %507 = vmatpush1.msra.mxu0 0.0
      %508 = vmatprep.subr.mxu0 0.0
      %509 = vmatpush1.msra.mxu0 0.0
      %510 = vmatprep.subr.mxu0 0.0
      %511 = vmatpush1.msra.mxu0 0.0
      %512 = vmatprep.subr.mxu0 0.0
      %513 = vmatpush1.msra.mxu0 0.0
      %514 = vmatprep.subr.mxu0 0.0
      %515 = vmatpush1.msra.mxu0 0.0
      %516 = vmatprep.subr.mxu0 0.0
      %517 = vmatpush1.msra.mxu0 0.0
      %518 = vmatprep.subr.mxu0 0.0
      %519 = vmatpush1.msra.mxu0 0.0
      %520 = vmatprep.subr.mxu0 0.0
      %521 = vmatpush1.msra.mxu0 0.0
      %522 = vmatprep.subr.mxu0 0.0
      %523 = vmatpush1.msra.mxu0 0.0
      %524 = vmatprep.subr.mxu0 0.0
      %525 = vmatpush1.msra.mxu0 0.0
      %526 = vmatprep.subr.mxu0 0.0
      %527 = vmatpush1.msra.mxu0 0.0
      %528 = vmatprep.mubr.f32.mxu0 0.0
      %529 = vmatmul.mubr.f32.gmra.mrb[0].mxu0 %v446
      %v530 = vpop.f32.mrb[0].mxu0
      %v531 = vadd.f32 %v432, %v530
      %v532 = vpop.f32.mrb[0].mxu0
      %v533 = vadd.f32 %v432, %v532
      %534 = vmatprep.mubr.f32.mxu0 0.0
      %535 = vmatmul.mubr.f32.gmra.mrb[0].mxu0 %v449
      %v536 = vpop.f32.mrb[0].mxu0
      %v537 = vadd.f32 %v437, %v536
      %v538 = vpop.f32.mrb[0].mxu0
      %v539 = vadd.f32 %v437, %v538
      %540 = vmatprep.mubr.f32.mxu0 0.0
      %541 = vmatmul.mubr.f32.gmra.mrb[0].mxu0 %v452
      %v542 = vpop.f32.mrb[0].mxu0
      %v543 = vadd.f32 %v442, %v542
      %v544 = vpop.f32.mrb[0].mxu0
      %v545 = vadd.f32 %v442, %v544
      %546 = vdwg.mxu0
      %547 = vmatprep.subr.mxu0 0.0
      %548 = vmatpush1.msra.mxu0 %v413
      %549 = vmatprep.subr.mxu0 0.0
      %550 = vmatpush1.msra.mxu0 %v416
      %551 = vmatprep.subr.mxu0 0.0
      %552 = vmatpush1.msra.mxu0 %v419
      %553 = vmatprep.subr.mxu0 0.0
      %554 = vmatpush1.msra.mxu0 %v422
      %555 = vmatprep.subr.mxu0 0.0
      %556 = vmatpush1.msra.mxu0 %v462
      %557 = vmatprep.subr.mxu0 0.0
      %558 = vmatpush1.msra.mxu0 0.0
      %559 = vmatprep.subr.mxu0 0.0
      %560 = vmatpush1.msra.mxu0 0.0
      %561 = vmatprep.subr.mxu0 0.0
      %562 = vmatpush1.msra.mxu0 0.0
      %563 = vmatprep.subr.mxu0 0.0
      %564 = vmatpush1.msra.mxu0 0.0
      %565 = vmatprep.subr.mxu0 0.0
      %566 = vmatpush1.msra.mxu0 0.0
      %567 = vmatprep.subr.mxu0 0.0
      %568 = vmatpush1.msra.mxu0 0.0
      %569 = vmatprep.subr.mxu0 0.0
      %570 = vmatpush1.msra.mxu0 0.0
      %571 = vmatprep.subr.mxu0 0.0
      %572 = vmatpush1.msra.mxu0 0.0
      %573 = vmatprep.subr.mxu0 0.0
      %574 = vmatpush1.msra.mxu0 0.0
      %575 = vmatprep.subr.mxu0 0.0
      %576 = vmatpush1.msra.mxu0 0.0
      %577 = vmatprep.subr.mxu0 0.0
      %578 = vmatpush1.msra.mxu0 0.0
      %579 = vmatprep.subr.mxu0 0.0
      %580 = vmatpush1.msra.mxu0 0.0
      %581 = vmatprep.subr.mxu0 0.0
      %582 = vmatpush1.msra.mxu0 0.0
      %583 = vmatprep.subr.mxu0 0.0
      %584 = vmatpush1.msra.mxu0 0.0
      %585 = vmatprep.subr.mxu0 0.0
      %586 = vmatpush1.msra.mxu0 0.0
      %587 = vmatprep.subr.mxu0 0.0
      %588 = vmatpush1.msra.mxu0 0.0
      %589 = vmatprep.subr.mxu0 0.0
      %590 = vmatpush1.msra.mxu0 0.0
      %591 = vmatprep.subr.mxu0 0.0
      %592 = vmatpush1.msra.mxu0 0.0
      %593 = vmatprep.subr.mxu0 0.0
      %594 = vmatpush1.msra.mxu0 0.0
      %595 = vmatprep.subr.mxu0 0.0
      %596 = vmatpush1.msra.mxu0 0.0
      %597 = vmatprep.subr.mxu0 0.0
      %598 = vmatpush1.msra.mxu0 0.0
      %599 = vmatprep.subr.mxu0 0.0
      %600 = vmatpush1.msra.mxu0 0.0
      %601 = vmatprep.subr.mxu0 0.0
      %602 = vmatpush1.msra.mxu0 0.0
      %603 = vmatprep.subr.mxu0 0.0
      %604 = vmatpush1.msra.mxu0 0.0
      %605 = vmatprep.subr.mxu0 0.0
      %606 = vmatpush1.msra.mxu0 0.0
      %607 = vmatprep.subr.mxu0 0.0
      %608 = vmatpush1.msra.mxu0 0.0
      %609 = vmatprep.subr.mxu0 0.0
      %610 = vmatpush1.msra.mxu0 0.0
      %611 = vmatprep.mubr.f32.mxu0 0.0
      %612 = vmatmul.mubr.f32.gmra.mrb[0].mxu0 %v446
      %v613 = vpop.f32.mrb[0].mxu0
      %v614 = vadd.f32 %v432, %v613
      %v615 = vpop.f32.mrb[0].mxu0
      %616 = vmatprep.mubr.f32.mxu0 0.0
      %617 = vmatmul.mubr.f32.gmra.mrb[0].mxu0 %v449
      %v618 = vpop.f32.mrb[0].mxu0
      %v619 = vadd.f32 %v437, %v618
      %v620 = vpop.f32.mrb[0].mxu0
      %621 = vmatprep.mubr.f32.mxu0 0.0
      %622 = vmatmul.mubr.f32.gmra.mrb[0].mxu0 %v452
      %v623 = vpop.f32.mrb[0].mxu0
      %v624 = vadd.f32 %v442, %v623
      %v625 = vpop.f32.mrb[0].mxu0
      %626 = vdwg.mxu0
      %v627 = vand.u32 2147483647, %v531
      %v628 = vand.u32 2147483647, %v533
      %v629 = vand.u32 2147483647, %v614
      %v630 = vand.u32 2147483647, %v537
      %v631 = vand.u32 2147483647, %v539
      %v632 = vand.u32 2147483647, %v619
      %v633 = vand.u32 2147483647, %v543
      %v634 = vand.u32 2147483647, %v545
      %v635 = vand.u32 2147483647, %v624
      %v636 = vadd.f32 %v627, %v630
      %v637 = vadd.f32 %v636, %v633
      %v638 = vrot.slane %v637, 4
      %v639 = vadd.f32 %v637, %v638
      %v640 = vrot.slane %v639, 2
      %v641 = vadd.f32 %v639, %v640
      %v642 = vrot.slane %v641, 1
      %v643 = vadd.f32 %v641, %v642
      %v644 = vadd.f32 %v628, %v631
      %v645 = vadd.f32 %v644, %v634
      %v646 = vrot.slane %v645, 4
      %v647 = vadd.f32 %v645, %v646
      %v648 = vrot.slane %v647, 2
      %v649 = vadd.f32 %v647, %v648
      %v650 = vrot.slane %v649, 1
      %v651 = vadd.f32 %v649, %v650
      %v652 = vadd.f32 %v629, %v632
      %v653 = vadd.f32 %v652, %v635
      %v654 = vrot.slane %v653, 4
      %v655 = vadd.f32 %v653, %v654
      %v656 = vrot.slane %v655, 2
      %v657 = vadd.f32 %v655, %v656
      %v658 = vrot.slane %v657, 1
      %v659 = vadd.f32 %v657, %v658
      %v660 = vadd.f32 %v531, %v537
      %v661 = vadd.f32 %v660, %v543
      %v662 = vrot.slane %v661, 4
      %v663 = vadd.f32 %v661, %v662
      %v664 = vrot.slane %v663, 2
      %v665 = vadd.f32 %v663, %v664
      %v666 = vrot.slane %v665, 1
      %v667 = vadd.f32 %v665, %v666
      %v668 = vadd.f32 %v533, %v539
      %v669 = vadd.f32 %v668, %v545
      %v670 = vrot.slane %v669, 4
      %v671 = vadd.f32 %v669, %v670
      %v672 = vrot.slane %v671, 2
      %v673 = vadd.f32 %v671, %v672
      %v674 = vrot.slane %v673, 1
      %v675 = vadd.f32 %v673, %v674
      %v676 = vadd.f32 %v614, %v619
      %v677 = vadd.f32 %v676, %v624
      %v678 = vrot.slane %v677, 4
      %v679 = vadd.f32 %v677, %v678
      %v680 = vrot.slane %v679, 2
      %v681 = vadd.f32 %v679, %v680
      %v682 = vrot.slane %v681, 1
      %v683 = vadd.f32 %v681, %v682
      %v684 = vrcp.pop %v643
      %v685 = vrcp.pop %v651
      %v686 = vrcp.pop %v659
      %v687 = vmul.f32 %v531, %v684
      %v688 = vmul.f32 %v533, %v685
      %v689 = vmul.f32 %v614, %v686
      %v690 = vmul.f32 %v537, %v684
      %v691 = vmul.f32 %v539, %v685
      %v692 = vmul.f32 %v619, %v686
      %v693 = vmul.f32 %v543, %v684
      %v694 = vmul.f32 %v545, %v685
      %v695 = vmul.f32 %v624, %v686
      %v696 = vmul.f32 %v667, %v684
      %v697 = vmul.f32 %v675, %v685
      %v698 = vmul.f32 %v683, %v686
      %v699 = vsub.f32 1.0, %v696
      %v700 = vsub.f32 1.0, %v697
      %v701 = vsub.f32 1.0, %v698
      %vm708 = vcmask 1040384
      %v709 = vrot.slane %v690, 7
      %v710 = vrot.slane %v691, 7
      %v711 = vrot.slane %v692, 7
      %v712 = vrot.slane %v693, 7
      %v713 = vsel %vm708, %v709, %v712
      %v714 = vrot.slane %v694, 7
      %v715 = vsel %vm708, %v710, %v714
      %v716 = vrot.slane %v695, 7
      %v717 = vsel %vm708, %v711, %v716
      %v727 = vsel %vm454, %v690, %v699
      %v728 = vsel %vm454, %v691, %v700
      %v729 = vsel %vm454, %v692, %v701
      %vm730 = vcmask 1044480
      %v731 = vsel %vm730, %v727, %v709
      %v732 = vsel %vm730, %v728, %v710
      %v733 = vsel %vm730, %v729, %v711
      %734 = vst [vmem:[%s206] sm:$0xff] %v687
      %735 = vst [vmem:[%s206 + $0x8] sm:$0xff] %v688
      %736 = vst [vmem:[%s206 + $0x10] sm:$0xff] %v689
      %737 = vst [vmem:[%s206 + $0x18] sm:$0xff] %v731
      %738 = vst [vmem:[%s206 + $0x20] sm:$0xff] %v732
      %739 = vst [vmem:[%s206 + $0x28] sm:$0xff] %v733
      %740 = vst [vmem:[%s206 + $0x30] sm:$0xff] %v713
      %741 = vst [vmem:[%s206 + $0x38] sm:$0xff] %v715
      %742 = vst [vmem:[%s206 + $0x40] sm:$0xff] %v717
      %743 = vst [vmem:[%s206 + $0x48] sm:$0x1] %v712
      %744 = vst [vmem:[%s206 + $0x50] sm:$0x1] %v714
      %745 = vst [vmem:[%s206 + $0x58] sm:$0x1] %v716
      %s746 = smul.u32 3, %s19
      %p747 = scmp.lt.s32.totalorder %s18, 1
      %s748 = scalar_select %p747, %s18, 1
      %p749 = scmp.lt.s32.totalorder %s746, 2
      %s750 = scalar_select %p749, %s746, 2
      %s751 = smul.addr %s748, 12
      %s752 = sadd.s32 %s750, %s751
      %s753 = smul.addr %s752, 8
      %s754 = scalar_lea.vmem %s3, %s753
      // Predicated region
      $region33: #{cspn_generate.1} parent=31 // pred_check
        %p755 = pneg %p116
      $region34: #{cspn_generate.1} parent=31 // pred_check_branch
        %757 = sbr.rel (%p755) target = $region36
      $region35: #{cspn_generate.1} parent=31 // pred_region
        %s758 = smul.u32 3, %s19
      $region36: #{cspn_generate.1} parent=31 // pred_fallthru
        _
    $region32: #{cspn_generate.1} parent=5 // pred_fallthru
      _
    %p759 = scmp.le.s32.totalorder 2, %s9
    // Predicated region
    $region37: #{cspn_generate.1} parent=5 // pred_check
      %p760 = pneg %p759
    $region38: #{cspn_generate.1} parent=5 // pred_check_branch
      %762 = sbr.rel (%p760) target = $region40
    $region39: #{cspn_generate.1} parent=5 // pred_region
      %s763 = ssub.s32 %s9, 2
      // Predicated region
      $region41: #{cspn_generate.1} parent=39 // pred_check
        %p764 = pneg %p122
      $region42: #{cspn_generate.1} parent=39 // pred_check_branch
        %766 = sbr.rel (%p764) target = $region44
      $region43: #{cspn_generate.1} parent=39 // pred_region
        %s767 = smul.u32 3, %s21
        %p768 = scmp.lt.s32.totalorder %s20, 1
        %s769 = scalar_select %p768, %s20, 1
        %p770 = scmp.lt.s32.totalorder %s767, 2
        %s771 = scalar_select %p770, %s767, 2
        %s772 = smul.addr %s769, 12
        %s773 = sadd.s32 %s771, %s772
        %s774 = smul.addr %s773, 8
        %s775 = scalar_lea.vmem %s3, %s774
      $region44: #{cspn_generate.1} parent=39 // pred_fallthru
        _
    $region40: #{cspn_generate.1} parent=5 // pred_fallthru
      _
  $region6: #{cspn_generate.1} parent=0 // loop_footer
    %s13 = sadd.s32 1, %s9
  $region7: #{cspn_generate.1} parent=0 // loop_footer_branch
    %8 = sbr.rel target = $region3
  $region8: #{cspn_generate.1} parent=0 // loop_exit
    _

</llo_original>
